<compile_context>
chip_gen: v6e
topology: v6e:2x2x1
jax: 0.10.0
libtpu: 0.0.40
codegen_flags: <defaults>
</compile_context>

<pallas_src>
import jax
import jax.numpy as jnp
from jax.experimental import pallas as pl
from jax.experimental.pallas import tpu as pltpu


def convg_kernel(x_ref, a_ref, w_ref, o_ref):
    """Fused ConvG body for one graph of the batch.

    x_ref: [1, N, Cin]       bf16  node features
    a_ref: [1, N, N]         bf16  GCN-normalized dense adjacency
    w_ref: [Cin, Cout_pad]   bf16  shared projection weight (lane-padded)
    o_ref: [1, N, Cout_pad]  f32   output
    """
    x = x_ref[0]
    a = a_ref[0]
    # Propagate first at width Cin (<< Cout), then project:
    #   (A @ (A @ X)) @ W  ==  A @ (A @ (X @ W))
    h = jnp.dot(a, x, preferred_element_type=jnp.float32)                      # hop 1
    h = jnp.dot(a, h.astype(a.dtype), preferred_element_type=jnp.float32)      # hop 2
    out = jnp.dot(h.astype(w_ref.dtype), w_ref[...],
                  preferred_element_type=jnp.float32)                          # projection
    o_ref[0] = out.astype(o_ref.dtype)


def conv_g(x, a_hat, w):
    """Batched ConvG forward.

    x:     [B, N, Cin]  float32 node features
    a_hat: [B, N, N]    float32 GCN-normalized dense adjacency per graph
    w:     [Cin, Cout]  float32 (x @ w == x @ weight.T for PyTorch weight [out,in])
    returns [B, N, Cout] float32
    """
    B, N, Cin = x.shape
    Cout = w.shape[1]

    # Lane-dense output: pad feature dim to a multiple of 128 lanes.
    cout_pad = ((Cout + 127) // 128) * 128
    w_pad = jnp.zeros((Cin, cout_pad), w.dtype).at[:, :Cout].set(w)

    # bf16 inputs for the MXU; accumulation stays f32 inside the kernel.
    xb = x.astype(jnp.bfloat16)
    ab = a_hat.astype(jnp.bfloat16)
    wb = w_pad.astype(jnp.bfloat16)

    out = pl.pallas_call(
        convg_kernel,
        out_shape=jax.ShapeDtypeStruct((B, N, cout_pad), jnp.float32),
        grid_spec=pltpu.PrefetchScalarGridSpec(
            num_scalar_prefetch=0,
            grid=(B,),
            in_specs=[
                pl.BlockSpec((1, N, Cin), lambda b: (b, 0, 0)),
                pl.BlockSpec((1, N, N), lambda b: (b, 0, 0)),
                pl.BlockSpec((Cin, cout_pad), lambda b: (0, 0)),
            ],
            out_specs=pl.BlockSpec((1, N, cout_pad), lambda b: (b, 0, 0)),
        ),
        compiler_params=pltpu.CompilerParams(
            dimension_semantics=("parallel",),  # batch axis -> both TCs on v7x
        ),
    )(xb, ab, wb)

    return out[..., :Cout]


def gcn_norm_dense(edge_index, edge_weight, num_nodes):
    """Dense A_hat = D^{-1/2} (A + I) D^{-1/2}  (GCN normalization, self loops).

    Note: if edge_index already contains explicit self loops they are added on
    top of the eye(), which may differ slightly from PyG's gcn_norm.
    """
    row, col = edge_index[0], edge_index[1]
    if edge_weight is None:
        edge_weight = jnp.ones((row.shape[0],), dtype=jnp.float32)
    A = jnp.zeros((num_nodes, num_nodes), dtype=jnp.float32)
    A = A.at[row, col].add(edge_weight)
    A = A + jnp.eye(num_nodes, dtype=jnp.float32)
    deg = A.sum(axis=1)
    d_inv_sqrt = jnp.where(deg > 0, 1.0 / jnp.sqrt(deg), 0.0)
    return d_inv_sqrt[:, None] * A * d_inv_sqrt[None, :]


def conv_g_ref(x, a_hat, w):
    """Pure-JAX reference following the same bf16-in / f32-accumulate path."""
    xb = x.astype(jnp.bfloat16)
    ab = a_hat.astype(jnp.bfloat16)
    wb = w.astype(jnp.bfloat16)
    h = jnp.einsum('bnm,bmc->bnc', ab, xb, preferred_element_type=jnp.float32)
    h = jnp.einsum('bnm,bmc->bnc', ab, h.astype(jnp.bfloat16),
                   preferred_element_type=jnp.float32)
    return jnp.einsum('bnc,cd->bnd', h.astype(jnp.bfloat16), wb,
                      preferred_element_type=jnp.float32)


if __name__ == "__main__":
    key = jax.random.PRNGKey(0)
    k_x, k_w, k_e = jax.random.split(key, 3)

    # Small shapes consistent with a graph-classification forward pass.
    B = 4        # graphs batched into one pallas_call
    N = 16       # nodes per graph
    C_IN = 8     # in_channels
    C_OUT = 32   # out_channels

    # Node features.
    x = jax.random.normal(k_x, (B, N, C_IN), dtype=jnp.float32)

    # Linear weight, PyTorch default init U(-1/sqrt(in), 1/sqrt(in)).
    # PyTorch stores weight as [out, in]; we store its transpose [in, out].
    bound = 1.0 / jnp.sqrt(jnp.float32(C_IN))
    w = jax.random.uniform(k_w, (C_IN, C_OUT), dtype=jnp.float32,
                           minval=-bound, maxval=bound)

    # Deterministic random edges per graph; edge_weight = None.
    E = 40
    src = jax.random.randint(k_e, (B, E), 0, N)
    dst = jax.random.randint(jax.random.fold_in(k_e, 1), (B, E), 0, N)
    edge_index = jnp.stack([src, dst], axis=1)  # [B, 2, E]

    a_hat = jax.vmap(lambda ei: gcn_norm_dense(ei, None, N))(edge_index)

    out = conv_g(x, a_hat, w)
    out = jax.block_until_ready(out)

    # Correctness checks.
    ref_bf16 = conv_g_ref(x, a_hat, w)                       # same dtype path
    xw = jnp.einsum('bnc,cd->bnd', x, w)                     # original op order, f32
    ref_f32 = jnp.einsum('bnm,bmc->bnc', a_hat,
                         jnp.einsum('bnm,bmc->bnc', a_hat, xw))

    assert out.shape == (B, N, C_OUT)
    assert jnp.allclose(out, ref_bf16, atol=2e-2, rtol=2e-2)
    assert jnp.allclose(out, ref_f32, atol=1e-1, rtol=1e-1)

    print("KERNEL_OK")
</pallas_src>

<mosaic_0001>
module attributes {stable_mosaic.version = 11 : i64} {
  func.func @convg_kernel(%arg0: i32, %arg1: memref<1x16x8xbf16, #tpu.memory_space<vmem>>, %arg2: memref<1x16x16xbf16, #tpu.memory_space<vmem>>, %arg3: memref<8x128xbf16, #tpu.memory_space<vmem>>, %arg4: memref<1x16x128xf32, #tpu.memory_space<vmem>>) attributes {dimension_semantics = [#tpu.dimension_semantics<parallel>], iteration_bounds = array<i64: 4>, scalar_prefetch = 0 : i64, scratch_operands = 0 : i64, tpu.core_type = #tpu.core_type<tc>, window_params = [{transform_indices = @transform_0, window_bounds = array<i64: 1, 16, 8>}, {transform_indices = @transform_1, window_bounds = array<i64: 1, 16, 16>}, {pipeline_mode = #tpu.pipeline_mode<synchronous>, transform_indices = @transform_2, window_bounds = array<i64: 8, 128>}, {transform_indices = @transform_3, window_bounds = array<i64: 1, 16, 128>}]} {
    %c0 = arith.constant 0 : index
    %c0_0 = arith.constant 0 : index
    %c0_1 = arith.constant 0 : index
    %0 = vector.load %arg1[%c0, %c0_0, %c0_1] : memref<1x16x8xbf16, #tpu.memory_space<vmem>>, vector<1x16x8xbf16>
    %1 = vector.shape_cast %0 : vector<1x16x8xbf16> to vector<16x8xbf16>
    %c0_2 = arith.constant 0 : index
    %c0_3 = arith.constant 0 : index
    %c0_4 = arith.constant 0 : index
    %2 = vector.load %arg2[%c0_2, %c0_3, %c0_4] : memref<1x16x16xbf16, #tpu.memory_space<vmem>>, vector<1x16x16xbf16>
    %3 = vector.shape_cast %2 : vector<1x16x16xbf16> to vector<16x16xbf16>
    %cst = arith.constant dense<0.000000e+00> : vector<16x8xf32>
    %4 = tpu.matmul %3, %1, %cst {dimension_numbers = #tpu.dot_dimension_numbers<[1], [0], [0], [1], [0, 0, 1, 1], [], []>} : vector<16x16xbf16>, vector<16x8xbf16>, vector<16x8xf32> -> vector<16x8xf32>
    %5 = arith.truncf %4 : vector<16x8xf32> to vector<16x8xbf16>
    %cst_5 = arith.constant dense<0.000000e+00> : vector<16x8xf32>
    %6 = tpu.matmul %3, %5, %cst_5 {dimension_numbers = #tpu.dot_dimension_numbers<[1], [0], [0], [1], [0, 0, 1, 1], [], []>} : vector<16x16xbf16>, vector<16x8xbf16>, vector<16x8xf32> -> vector<16x8xf32>
    %7 = arith.truncf %6 : vector<16x8xf32> to vector<16x8xbf16>
    %c0_6 = arith.constant 0 : index
    %c0_7 = arith.constant 0 : index
    %8 = vector.load %arg3[%c0_6, %c0_7] : memref<8x128xbf16, #tpu.memory_space<vmem>>, vector<8x128xbf16>
    %cst_8 = arith.constant dense<0.000000e+00> : vector<16x128xf32>
    %9 = tpu.matmul %7, %8, %cst_8 {dimension_numbers = #tpu.dot_dimension_numbers<[1], [0], [0], [1], [0, 0, 1, 1], [], []>} : vector<16x8xbf16>, vector<8x128xbf16>, vector<16x128xf32> -> vector<16x128xf32>
    %c0_9 = arith.constant 0 : index
    %c0_10 = arith.constant 0 : index
    %c0_11 = arith.constant 0 : index
    %10 = vector.load %arg4[%c0_9, %c0_10, %c0_11] : memref<1x16x128xf32, #tpu.memory_space<vmem>>, vector<1x16x128xf32>
    %11 = vector.shape_cast %10 : vector<1x16x128xf32> to vector<16x128xf32>
    %12 = vector.shape_cast %9 : vector<16x128xf32> to vector<1x16x128xf32>
    tpu.vector_store %arg4[%c0_9, %c0_10, %c0_11], %12 {strides = array<i32>} : memref<1x16x128xf32, #tpu.memory_space<vmem>>, vector<1x16x128xf32>,
    return
  }
  func.func @transform_0(%arg0: i32) -> (i32, i32, i32) {
    %c0_i32 = arith.constant 0 : i32
    %c0_i32_0 = arith.constant 0 : i32
    %c0_i32_1 = arith.constant 0 : i32
    return %arg0, %c0_i32, %c0_i32_0 : i32, i32, i32
  }
  func.func @transform_1(%arg0: i32) -> (i32, i32, i32) {
    %c0_i32 = arith.constant 0 : i32
    %c0_i32_0 = arith.constant 0 : i32
    %c0_i32_1 = arith.constant 0 : i32
    return %arg0, %c0_i32, %c0_i32_0 : i32, i32, i32
  }
  func.func @transform_2(%arg0: i32) -> (i32, i32) {
    %c0_i32 = arith.constant 0 : i32
    %c0_i32_0 = arith.constant 0 : i32
    %c0_i32_1 = arith.constant 0 : i32
    return %c0_i32, %c0_i32_0 : i32, i32
  }
  func.func @transform_3(%arg0: i32) -> (i32, i32, i32) {
    %c0_i32 = arith.constant 0 : i32
    %c0_i32_0 = arith.constant 0 : i32
    %c0_i32_1 = arith.constant 0 : i32
    return %arg0, %c0_i32, %c0_i32_0 : i32, i32, i32
  }
}

</mosaic_0001>

<llo_original>
// kernel: tpu_custom_call.1
$region0: #{tpu_custom_call.1}
  #allocation0 [shape = 'u32[]', space=smem, size = 0x4, offset = 0x4, fixed_abs, tag = 'smem constant byte address 0x4 - core index']
  #allocation1 [shape = 'u32[144,128]{1,0:T(1,128)}', space=vmem, size = 0x12000, scoped, tag = 'internal scratch']
  %s0 = inlined_call_operand.vmem [shape: bf16[4,16,8], index: 0, kind: input, shape index: {}]
  %s1 = inlined_call_operand.vmem [shape: bf16[4,16,16], index: 1, kind: input, shape index: {}]
  %s2 = inlined_call_operand.vmem [shape: bf16[8,128], index: 2, kind: input, shape index: {}]
  %s3 = inlined_call_operand.hbm [shape: f32[4,16,128], index: 3, kind: output, shape index: {}]
  %s4 = sld [smem:[#allocation0]]
  $region45: #{tpu_custom_call.1} parent=0
    _
  %s6 = ssub.s32 1, %s4
  %s7 = scalar_select 0, %s6, %s4
  $region1: #{tpu_custom_call.1} parent=0
    #allocation2 [shape = 'u8[16384]{0}', space=vmem, size = 0x4000, scoped, tag = 'output window, operand 0']
    #allocation3 [shape = 's32[2]{0}', space=sflag, size = 0x8, scoped, tag = 'scoped memory for tpu_custom_call.1']
    %8 = vsyncpa [#allocation3], 0
    %s9 = scalar_lea.sflag [#allocation3], 1
    %10 = vsyncpa %s9, 0
    loop: start=0, step=1, limit=6
    $region2: #{tpu_custom_call.1} parent=1 // loop_pre_header
      _
    $region3: #{tpu_custom_call.1} parent=1 // loop_header
      %s12 = sphi 0, %s16
      %p13 = scmp.ge.s32.totalorder %s12, 6
      %s22 = sphi 0, %s24
      %s25 = sphi 0, %s22
      %s26 = sphi 0, %s25
      %s42 = sphi 0, %s26
      %s48 = sphi 0, %s50
      %s51 = sphi 0, %s48
      %s52 = sphi 0, %s51
      %s68 = sphi 0, %s52
      %s72 = sphi 0, %s72
      %s74 = sphi 0, %s72
      %s75 = sphi 0, %s74
      %s89 = sphi 0, %s75
      %s95 = sphi 0, %s97
      %s98 = sphi 0, %s95
      %s99 = sphi 0, %s98
      %s115 = sphi 0, %s99
    $region4: #{tpu_custom_call.1} parent=1 // loop_header_branch
      %15 = sbr.rel (%p13) target = $region8
    $region5: #{tpu_custom_call.1} parent=1 // loop_body
      %s17 = ssub.s32 %s12, 1
      %s18 = ssub.s32 %s12, 2
      %s19 = sadd.s32 %s12, 1
      %s20 = ssub.s32 %s12, %s19
      %p21 = scmp.eq.s32.totalorder %s20, 0
      %s23 = sadd.s32 %s22, 1
      %s24 = scalar_select %p21, %s22, %s23
      %p27 = pneg %p21
      %p28 = scmp.eq.s32.totalorder %s12, 3
      %p29 = por %p27, %p28
      %p30 = scmp.ne.s32.totalorder %s22, %s25
      %p31 = scmp.eq.s32.totalorder %s12, 0
      %p32 = por %p30, %p31
      %p33 = scmp.ne.s32.totalorder %s22, %s25
      %p34 = scmp.eq.s32.totalorder %s17, 3
      %p35 = por %p33, %p34
      %p36 = scmp.ne.s32.totalorder %s25, %s26
      %p37 = scmp.eq.s32.totalorder %s17, 0
      %p38 = por %p36, %p37
      %p39 = scmp.ne.s32.totalorder %s25, %s26
      %p40 = scmp.eq.s32.totalorder %s18, 3
      %p41 = por %p39, %p40
      %p43 = scmp.ne.s32.totalorder %s26, %s42
      %p44 = scmp.eq.s32.totalorder %s18, 0
      %p45 = por %p43, %p44
      %s46 = ssub.s32 %s12, %s19
      %p47 = scmp.eq.s32.totalorder %s46, 0
      %s49 = sadd.s32 %s48, 1
      %s50 = scalar_select %p47, %s48, %s49
      %p53 = pneg %p47
      %p54 = scmp.eq.s32.totalorder %s12, 3
      %p55 = por %p53, %p54
      %p56 = scmp.ne.s32.totalorder %s48, %s51
      %p57 = scmp.eq.s32.totalorder %s12, 0
      %p58 = por %p56, %p57
      %p59 = scmp.ne.s32.totalorder %s48, %s51
      %p60 = scmp.eq.s32.totalorder %s17, 3
      %p61 = por %p59, %p60
      %p62 = scmp.ne.s32.totalorder %s51, %s52
      %p63 = scmp.eq.s32.totalorder %s17, 0
      %p64 = por %p62, %p63
      %p65 = scmp.ne.s32.totalorder %s51, %s52
      %p66 = scmp.eq.s32.totalorder %s18, 3
      %p67 = por %p65, %p66
      %p69 = scmp.ne.s32.totalorder %s52, %s68
      %p70 = scmp.eq.s32.totalorder %s18, 0
      %p71 = por %p69, %p70
      %s73 = sadd.s32 %s72, 1
      %p76 = scmp.eq.s32.totalorder %s12, 3
      %p77 = scmp.ne.s32.totalorder %s72, %s74
      %p78 = scmp.eq.s32.totalorder %s12, 0
      %p79 = por %p77, %p78
      %p80 = scmp.ne.s32.totalorder %s72, %s74
      %p81 = scmp.eq.s32.totalorder %s17, 3
      %p82 = por %p80, %p81
      %p83 = scmp.ne.s32.totalorder %s74, %s75
      %p84 = scmp.eq.s32.totalorder %s17, 0
      %p85 = por %p83, %p84
      %p86 = scmp.ne.s32.totalorder %s74, %s75
      %p87 = scmp.eq.s32.totalorder %s18, 3
      %p88 = por %p86, %p87
      %p90 = scmp.ne.s32.totalorder %s75, %s89
      %p91 = scmp.eq.s32.totalorder %s18, 0
      %p92 = por %p90, %p91
      %s93 = ssub.s32 %s12, %s19
      %p94 = scmp.eq.s32.totalorder %s93, 0
      %s96 = sadd.s32 %s95, 1
      %s97 = scalar_select %p94, %s95, %s96
      %p100 = pneg %p94
      %p101 = scmp.eq.s32.totalorder %s12, 3
      %p102 = por %p100, %p101
      %p103 = scmp.ne.s32.totalorder %s95, %s98
      %p104 = scmp.eq.s32.totalorder %s12, 0
      %p105 = por %p103, %p104
      %p106 = scmp.ne.s32.totalorder %s95, %s98
      %p107 = scmp.eq.s32.totalorder %s17, 3
      %p108 = por %p106, %p107
      %p109 = scmp.ne.s32.totalorder %s98, %s99
      %p110 = scmp.eq.s32.totalorder %s17, 0
      %p111 = por %p109, %p110
      %p112 = scmp.ne.s32.totalorder %s98, %s99
      %p113 = scmp.eq.s32.totalorder %s18, 3
      %p114 = por %p112, %p113
      %p116 = scmp.ne.s32.totalorder %s99, %s115
      %p117 = scmp.eq.s32.totalorder %s18, 0
      %p118 = por %p116, %p117
      %p119 = scmp.le.s32.totalorder 1, %s12
      %p120 = scmp.lt.s32.totalorder %s12, 5
      %p121 = pnand %p119, %p120
      %p122 = pneg %p121
      // Predicated region
      $region9: #{tpu_custom_call.1} parent=5 // pred_check
        _
      $region10: #{tpu_custom_call.1} parent=5 // pred_check_branch
        %124 = sbr.rel (%p121) target = $region12
      $region11: #{tpu_custom_call.1} parent=5 // pred_region
        %s125 = ssub.s32 %s12, 1
        // Predicated region
        $region13: #{tpu_custom_call.1} parent=11 // pred_check
          %p126 = pneg %p85
        $region14: #{tpu_custom_call.1} parent=11 // pred_check_branch
          %128 = sbr.rel (%p126) target = $region16
        $region15: #{tpu_custom_call.1} parent=11 // pred_region
          _
        $region16: #{tpu_custom_call.1} parent=11 // pred_fallthru
          _
      $region12: #{tpu_custom_call.1} parent=5 // pred_fallthru
        _
      %p129 = scmp.lt.s32.totalorder %s12, 4
      // Predicated region
      $region17: #{tpu_custom_call.1} parent=5 // pred_check
        %p130 = pneg %p129
      $region18: #{tpu_custom_call.1} parent=5 // pred_check_branch
        %132 = sbr.rel (%p130) target = $region20
      $region19: #{tpu_custom_call.1} parent=5 // pred_region
        // Predicated region
        $region21: #{tpu_custom_call.1} parent=19 // pred_check
          %p133 = pneg %p32
        $region22: #{tpu_custom_call.1} parent=19 // pred_check_branch
          %135 = sbr.rel (%p133) target = $region24
        $region23: #{tpu_custom_call.1} parent=19 // pred_region
          %p136 = scmp.lt.s32.totalorder %s12, 3
          %s137 = scalar_select %p136, %s12, 3
          %s138 = smul.addr %s137, 2
          %s139 = smul.addr %s138, 4
          %s140 = scalar_lea.vmem %s0, %s139
        $region24: #{tpu_custom_call.1} parent=19 // pred_fallthru
          _
        // Predicated region
        $region25: #{tpu_custom_call.1} parent=19 // pred_check
          %p141 = pneg %p58
        $region26: #{tpu_custom_call.1} parent=19 // pred_check_branch
          %143 = sbr.rel (%p141) target = $region28
        $region27: #{tpu_custom_call.1} parent=19 // pred_region
          %p144 = scmp.lt.s32.totalorder %s12, 3
          %s145 = scalar_select %p144, %s12, 3
          %s146 = smul.addr %s145, 2
          %s147 = smul.addr %s146, 4
          %s148 = scalar_lea.vmem %s1, %s147
        $region28: #{tpu_custom_call.1} parent=19 // pred_fallthru
          _
      $region20: #{tpu_custom_call.1} parent=5 // pred_fallthru
        _
      %p149 = scmp.le.s32.totalorder 1, %s12
      %p150 = scmp.lt.s32.totalorder %s12, 5
      %p151 = pnand %p149, %p150
      %p152 = pneg %p151
      // Predicated region
      $region29: #{tpu_custom_call.1} parent=5 // pred_check
        _
      $region30: #{tpu_custom_call.1} parent=5 // pred_check_branch
        %154 = sbr.rel (%p151) target = $region32
      $region31: #{tpu_custom_call.1} parent=5 // pred_region
        %s155 = ssub.s32 %s12, 1
        %p156 = scmp.lt.s32.totalorder %s17, 3
        %s157 = scalar_select %p156, %s17, 3
        %s158 = smul.addr %s157, 2
        %s159 = smul.addr %s158, 4
        %s160 = scalar_lea.vmem %s0, %s159
        %p161 = pneg %p38
        %p162 = pneg %p35
        %p163 = scmp.lt.s32.totalorder %s17, 3
        %s164 = scalar_select %p163, %s17, 3
        %s165 = smul.addr %s164, 2
        %s166 = smul.addr %s165, 4
        %s167 = scalar_lea.vmem %s1, %s166
        %p168 = pneg %p64
        %p169 = pneg %p61
        %p170 = pneg %p85
        %p171 = pneg %p82
        %p172 = pneg %p111
        %p173 = pneg %p108
        %s174 = sand.u32 %s98, 1
        %s175 = scalar_lea.sflag [#allocation3], %s174
        %s176 = sand.u32 %s98, 1
        %s177 = smul.addr %s176, 16
        %s178 = scalar_lea.vmem [#allocation2], %s177
        %p179 = scmp.lt.s32.totalorder %s17, 3
        %s180 = scalar_select %p179, %s17, 3
        %s181 = smul.addr %s180, 2
        %s182 = smul.addr %s181, 4
        %s183 = scalar_lea.vmem %s0, %s182
        %p184 = scmp.lt.s32.totalorder %s17, 3
        %s185 = scalar_select %p184, %s17, 3
        %s186 = smul.addr %s185, 2
        %s187 = smul.addr %s186, 4
        %s188 = scalar_lea.vmem %s1, %s187
        %v190 = vld [vmem:[%s183] sm:$0xf]
        %v191 = vld [vmem:[%s183 + $0x4] sm:$0xf]
        %v192 = vld [vmem:[%s188] sm:$0xf]
        %v193 = vld [vmem:[%s188 + $0x4] sm:$0xf]
        %v196 = vunpack.c.l.b16 %v192
        %v197 = vunpack.c.l.b16 %v193
        %v198 = vpack.c.b16 %v197, %v196
        %v201 = vunpack.c.l.b16 %v190
        %v202 = vunpack.c.l.b16 %v191
        %v203 = vpack.c.b16 %v202, %v201
        %vm205 = vcmask 130048
        %v207 = vsel %vm205, %v198, 0
        %209 = vmatprep.subr.bf16.mxu0 0
        %210 = vmatpush1.bf16.msra.mxu0 0
        %211 = vmatprep.subr.bf16.mxu0 0
        %212 = vmatpush1.bf16.msra.mxu0 0
        %213 = vmatprep.subr.bf16.mxu0 0
        %214 = vmatpush1.bf16.msra.mxu0 0
        %215 = vmatprep.subr.bf16.mxu0 0
        %216 = vmatpush1.bf16.msra.mxu0 0
        %217 = vmatprep.subr.bf16.mxu0 0
        %218 = vmatpush1.bf16.msra.mxu0 0
        %219 = vmatprep.subr.bf16.mxu0 0
        %220 = vmatpush1.bf16.msra.mxu0 0
        %221 = vmatprep.subr.bf16.mxu0 0
        %222 = vmatpush1.bf16.msra.mxu0 0
        %223 = vmatprep.subr.bf16.mxu0 0
        %224 = vmatpush1.bf16.msra.mxu0 %v203
        %225 = vmatprep.subr.bf16.mxu0 0
        %226 = vmatpush2.bf16.msra.mxu0 0
        %227 = vmatprep.subr.bf16.mxu0 0
        %228 = vmatpush2.bf16.msra.mxu0 0
        %229 = vmatprep.subr.bf16.mxu0 0
        %230 = vmatpush2.bf16.msra.mxu0 0
        %231 = vmatprep.subr.bf16.mxu0 0
        %232 = vmatpush2.bf16.msra.mxu0 0
        %233 = vmatprep.subr.bf16.mxu0 0
        %234 = vmatpush2.bf16.msra.mxu0 0
        %235 = vmatprep.subr.bf16.mxu0 0
        %236 = vmatpush2.bf16.msra.mxu0 0
        %237 = vmatprep.subr.bf16.mxu0 0
        %238 = vmatpush2.bf16.msra.mxu0 0
        %239 = vmatprep.subr.bf16.mxu0 0
        %240 = vmatpush2.bf16.msra.mxu0 0
        %241 = vmatprep.mubr.bf16.mxu0 0
        %242 = vmatmul.mubr.bf16.gmra.mxu0 %v207
        %v243 = vpop.f32.mrf.mxu0
        %v244 = vadd.f32 0.0, %v243
        %v245 = vpop.f32.mrf.mxu0
        %v246 = vpop.f32.mrf.mxu0
        %v247 = vadd.f32 0.0, %v246
        %v248 = vpop.f32.mrf.mxu0
        %249 = vdwg.mxu0
        %v250 = vpack.c.bf16 %v247, %v244
        %251 = vmatprep.subr.bf16.mxu0 0
        %252 = vmatpush1.bf16.msra.mxu0 0
        %253 = vmatprep.subr.bf16.mxu0 0
        %254 = vmatpush1.bf16.msra.mxu0 0
        %255 = vmatprep.subr.bf16.mxu0 0
        %256 = vmatpush1.bf16.msra.mxu0 0
        %257 = vmatprep.subr.bf16.mxu0 0
        %258 = vmatpush1.bf16.msra.mxu0 0
        %259 = vmatprep.subr.bf16.mxu0 0
        %260 = vmatpush1.bf16.msra.mxu0 0
        %261 = vmatprep.subr.bf16.mxu0 0
        %262 = vmatpush1.bf16.msra.mxu0 0
        %263 = vmatprep.subr.bf16.mxu0 0
        %264 = vmatpush1.bf16.msra.mxu0 0
        %265 = vmatprep.subr.bf16.mxu0 0
        %266 = vmatpush1.bf16.msra.mxu0 %v250
        %267 = vmatprep.subr.bf16.mxu0 0
        %268 = vmatpush2.bf16.msra.mxu0 0
        %269 = vmatprep.subr.bf16.mxu0 0
        %270 = vmatpush2.bf16.msra.mxu0 0
        %271 = vmatprep.subr.bf16.mxu0 0
        %272 = vmatpush2.bf16.msra.mxu0 0
        %273 = vmatprep.subr.bf16.mxu0 0
        %274 = vmatpush2.bf16.msra.mxu0 0
        %275 = vmatprep.subr.bf16.mxu0 0
        %276 = vmatpush2.bf16.msra.mxu0 0
        %277 = vmatprep.subr.bf16.mxu0 0
        %278 = vmatpush2.bf16.msra.mxu0 0
        %279 = vmatprep.subr.bf16.mxu0 0
        %280 = vmatpush2.bf16.msra.mxu0 0
        %281 = vmatprep.subr.bf16.mxu0 0
        %282 = vmatpush2.bf16.msra.mxu0 0
        %283 = vmatprep.mubr.bf16.mxu0 0
        %284 = vmatmul.mubr.bf16.gmra.mxu0 %v207
        %v285 = vpop.f32.mrf.mxu0
        %v286 = vadd.f32 0.0, %v285
        %v287 = vpop.f32.mrf.mxu0
        %v288 = vpop.f32.mrf.mxu0
        %v289 = vadd.f32 0.0, %v288
        %v290 = vpop.f32.mrf.mxu0
        %291 = vdwg.mxu0
        %v292 = vpack.c.bf16 %v289, %v286
        %v293 = vld [vmem:[%s2] sm:$0xf]
        %vm294 = vcmask 64512
        %v296 = vsel %vm294, %v292, 0
        %vm298 = vcmask 1043456
        %v300 = vsel %vm298, %v293, 0
        %302 = vmatprep.subr.bf16.mxu0 0
        %303 = vmatpush1.bf16.msra.mxu0 0
        %304 = vmatprep.subr.bf16.mxu0 0
        %305 = vmatpush1.bf16.msra.mxu0 0
        %306 = vmatprep.subr.bf16.mxu0 0
        %307 = vmatpush1.bf16.msra.mxu0 0
        %308 = vmatprep.subr.bf16.mxu0 0
        %309 = vmatpush1.bf16.msra.mxu0 0
        %310 = vmatprep.subr.bf16.mxu0 0
        %311 = vmatpush1.bf16.msra.mxu0 0
        %312 = vmatprep.subr.bf16.mxu0 0
        %313 = vmatpush1.bf16.msra.mxu0 0
        %314 = vmatprep.subr.bf16.mxu0 0
        %315 = vmatpush1.bf16.msra.mxu0 0
        %316 = vmatprep.subr.bf16.mxu0 0
        %317 = vmatpush1.bf16.msra.mxu0 %v300
        %318 = vmatprep.subr.bf16.mxu0 0
        %319 = vmatpush2.bf16.msra.mxu0 0
        %320 = vmatprep.subr.bf16.mxu0 0
        %321 = vmatpush2.bf16.msra.mxu0 0
        %322 = vmatprep.subr.bf16.mxu0 0
        %323 = vmatpush2.bf16.msra.mxu0 0
        %324 = vmatprep.subr.bf16.mxu0 0
        %325 = vmatpush2.bf16.msra.mxu0 0
        %326 = vmatprep.subr.bf16.mxu0 0
        %327 = vmatpush2.bf16.msra.mxu0 0
        %328 = vmatprep.subr.bf16.mxu0 0
        %329 = vmatpush2.bf16.msra.mxu0 0
        %330 = vmatprep.subr.bf16.mxu0 0
        %331 = vmatpush2.bf16.msra.mxu0 0
        %332 = vmatprep.subr.bf16.mxu0 0
        %333 = vmatpush2.bf16.msra.mxu0 0
        %334 = vmatprep.mubr.bf16.mxu0 0
        %335 = vmatmul.mubr.bf16.gmra.mxu0 %v296
        %v336 = vpop.f32.mrf.mxu0
        %v337 = vadd.f32 0.0, %v336
        %v338 = vpop.f32.mrf.mxu0
        %v339 = vpop.f32.mrf.mxu0
        %v340 = vadd.f32 0.0, %v339
        %v341 = vpop.f32.mrf.mxu0
        %342 = vdwg.mxu0
        %343 = vst [vmem:[%s178] sm:$0xff] %v337
        %344 = vst [vmem:[%s178 + $0x8] sm:$0xff] %v340
        %s345 = sand.u32 %s98, 1
        %s346 = scalar_lea.sflag [#allocation3], %s345
        %s347 = sand.u32 %s98, 1
        %s348 = smul.addr %s347, 16
        %s349 = scalar_lea.vmem [#allocation2], %s348
        // Predicated region
        $region33: #{tpu_custom_call.1} parent=31 // pred_check
          %p350 = pneg %p108
        $region34: #{tpu_custom_call.1} parent=31 // pred_check_branch
          %352 = sbr.rel (%p350) target = $region36
        $region35: #{tpu_custom_call.1} parent=31 // pred_region
          %s354 = ssub.s32 256, 256
          %355 = vsyncadd %s346, %s354
          %s356 = smul.addr %s17, 2
          %s357 = smul.addr %s356, 128
          %s358 = scalar_lea.hbm %s3, %s357
          %s359 = sshll.u32 %s349, 4
          %s360 = int_to_ptr.vmem [resolvable:$true] %s359
          %365 = dma.vmem_to_hbm [thread:$0]  %s360, 256, %s358, %s346, 128, 128, 8
        $region36: #{tpu_custom_call.1} parent=31 // pred_fallthru
          _
      $region32: #{tpu_custom_call.1} parent=5 // pred_fallthru
        _
      %p366 = scmp.le.s32.totalorder 2, %s12
      // Predicated region
      $region37: #{tpu_custom_call.1} parent=5 // pred_check
        %p367 = pneg %p366
      $region38: #{tpu_custom_call.1} parent=5 // pred_check_branch
        %369 = sbr.rel (%p367) target = $region40
      $region39: #{tpu_custom_call.1} parent=5 // pred_region
        %s370 = ssub.s32 %s12, 2
        // Predicated region
        $region41: #{tpu_custom_call.1} parent=39 // pred_check
          %p371 = pneg %p114
        $region42: #{tpu_custom_call.1} parent=39 // pred_check_branch
          %373 = sbr.rel (%p371) target = $region44
        $region43: #{tpu_custom_call.1} parent=39 // pred_region
          %s374 = sand.u32 %s99, 1
          %s375 = scalar_lea.sflag [#allocation3], %s374
          %s376 = sand.u32 %s99, 1
          %s377 = smul.addr %s376, 16
          %s378 = scalar_lea.vmem [#allocation2], %s377
          %379 = dma.done %s375, 256
        $region44: #{tpu_custom_call.1} parent=39 // pred_fallthru
          _
      $region40: #{tpu_custom_call.1} parent=5 // pred_fallthru
        _
    $region6: #{tpu_custom_call.1} parent=1 // loop_footer
      %s16 = sadd.s32 1, %s12
    $region7: #{tpu_custom_call.1} parent=1 // loop_footer_branch
      %11 = sbr.rel target = $region3
    $region8: #{tpu_custom_call.1} parent=1 // loop_exit
      _
    %380 = vsyncpa [#allocation3], 1
    %s381 = scalar_lea.sflag [#allocation3], 1
    %382 = vsyncpa %s381, 1

</llo_original>
